<compile_context>
chip_gen: v7x
topology: tpu7x:2x2x1
jax: 0.10.0
libtpu: 0.0.40
codegen_flags: <defaults>
</compile_context>

<pallas_src>
import math
import functools

import jax
import jax.numpy as jnp
from jax.experimental import pallas as pl
from jax.experimental.pallas import tpu as pltpu

LOG2PI = math.log(2.0 * math.pi)


def _round_up(n, m):
    return (n + m - 1) // m * m


def _guided_flow_loss_kernel(x_ref, cls_ref, w_ref, b_ref, mu_ref, out_ref,
                             *, sig1, sig2):
    """One (core, batch-tile) grid step.

    out_ref is a lane-dense (8, 128) f32 block, resident across the batch-tile
    ("arbitrary") axis; lanes 0..4 of sublane 0 hold the running partials:
      [sum lp_gmm (valid rows), sum lp_guid0 (lvl1), sum lp_guid1 (lvl2),
       count lvl1, count lvl2]
    """
    t = pl.program_id(1)

    @pl.when(t == 0)
    def _():
        out_ref[...] = jnp.zeros_like(out_ref)

    x = x_ref[...]                       # (TB, D) bf16 stream
    w = w_ref[...]                       # (D, D)  bf16 resident
    d = x.shape[1]                       # true feature dim (never padded)

    # ---- flow forward: z = x @ W + b (bf16 operands, f32 MXU accumulation) ----
    z = jnp.dot(x, w, preferred_element_type=jnp.float32) + b_ref[...]   # (TB,D) f32

    # ---- shared squared distances to both GMM components (f32, direct form) ----
    diff0 = z - mu_ref[0:1, :]
    diff1 = z - mu_ref[1:2, :]
    sq0 = jnp.sum(diff0 * diff0, axis=1, keepdims=True)                  # (TB, 1)
    sq1 = jnp.sum(diff1 * diff1, axis=1, keepdims=True)                  # (TB, 1)

    # ---- GMM prior log_prob (unit std, 0.5/0.5 weights), stable 2-way LSE ----
    lpc0 = -0.5 * sq0 - 0.5 * d * LOG2PI
    lpc1 = -0.5 * sq1 - 0.5 * d * LOG2PI
    m = jnp.maximum(lpc0, lpc1)
    lp_gmm = m + jnp.log(jnp.exp(lpc0 - m) + jnp.exp(lpc1 - m)) + math.log(0.5)

    # ---- guidance log-probs reuse the same squared distances ----
    # (Scalar constants are literals — no captured array constants.)
    lg0 = (-0.5 / (sig1 * sig1)) * sq0 - d * (math.log(sig1) + 0.5 * LOG2PI)
    lg1 = (-0.5 / (sig2 * sig2)) * sq1 - d * (math.log(sig2) + 0.5 * LOG2PI)

    # ---- class column: 0.0 = lvl1, 1.0 = lvl2, 2.0 = padded row (ignored) ----
    cls = cls_ref[...]                                                   # (TB, 1)
    g1 = jnp.where(cls == 1.0, 1.0, 0.0)
    g0 = jnp.where(cls == 0.0, 1.0, 0.0)
    valid = g0 + g1

    # ---- accumulate the five partials into the resident lane-dense block ----
    # (HBM writeback of the (8,128) block happens once per core.)
    out_ref[0:1, 0:1] += jnp.sum(valid * lp_gmm, axis=0, keepdims=True)
    out_ref[0:1, 1:2] += jnp.sum(g0 * lg0, axis=0, keepdims=True)
    out_ref[0:1, 2:3] += jnp.sum(g1 * lg1, axis=0, keepdims=True)
    out_ref[0:1, 3:4] += jnp.sum(g0, axis=0, keepdims=True)
    out_ref[0:1, 4:5] += jnp.sum(g1, axis=0, keepdims=True)


def _const_spec(shape):
    """Resident (never-changing) operand: single-buffered when supported."""
    idx = lambda c, t: (0, 0)
    try:
        return pl.BlockSpec(shape, idx, pipeline_mode=pl.Buffered(1))
    except Exception:
        return pl.BlockSpec(shape, idx)


def guided_flow_loss(x, mask_lvl2, W, b, mu, lam1, sig1, lam2, sig2, *,
                     num_cores=1, x_tile_bytes=4 << 20, max_tb=8192):
    """Scalar guided-flow loss. Heavy work in one Pallas kernel; tiny JAX finalize.

    num_cores: 1 on single-TensorCore chips (v5e / v6e); set 2 on v7x, where the
    leading grid axis is marked CORE_PARALLEL so both TensorCores split the batch.
    """
    B, D = x.shape
    W_f32 = W.astype(jnp.float32)                 # full-precision copy for slogdet
    b2 = b.reshape(1, D).astype(jnp.float32)
    mu2 = mu.reshape(2, D).astype(jnp.float32)

    # bf16 streaming operands (f32 accumulation in-kernel) -> ~2x HBM / MXU.
    x_in = x.astype(jnp.bfloat16)
    w_in = W_f32.astype(jnp.bfloat16)

    NC = max(int(num_cores), 1)
    rows_per_core = -(-B // NC)

    # Batch-tile rows from a VMEM byte budget (~x_tile_bytes per bf16 x buffer),
    # rounded to 8 sublanes — amortizes the ~0.35 us per-grid-step overhead.
    budget_rows = max((int(x_tile_bytes) // (D * 2)) // 8 * 8, 8)
    TB = min(_round_up(rows_per_core, 8), budget_rows, int(max_tb))
    tiles_per_core = -(-rows_per_core // TB)
    B_pad = NC * tiles_per_core * TB
    pad = B_pad - B

    # Single class column replaces the old (B, 2) f32 mask matrix.
    cls = jnp.where(mask_lvl2, 1.0, 0.0).astype(jnp.float32).reshape(B, 1)
    x_p = jnp.pad(x_in, ((0, pad), (0, 0)))
    cls_p = jnp.pad(cls, ((0, pad), (0, 0)), constant_values=2.0)

    kernel = functools.partial(_guided_flow_loss_kernel,
                               sig1=float(sig1), sig2=float(sig2))

    x_spec = pl.BlockSpec((TB, D), lambda c, t: (c * tiles_per_core + t, 0))
    cls_spec = pl.BlockSpec((TB, 1), lambda c, t: (c * tiles_per_core + t, 0))
    w_spec = _const_spec((D, D))
    b_spec = _const_spec((1, D))
    mu_spec = _const_spec((2, D))
    out_spec = pl.BlockSpec((None, 8, 128), lambda c, t: (c, 0, 0))
    out_shape = jax.ShapeDtypeStruct((NC, 8, 128), jnp.float32)

    # VMEM request: actual need + headroom, capped per generation (never the
    # whole 64 MiB physical VMEM of a v7x TensorCore).
    need = (2 * TB * D * 2            # x, double-buffered bf16
            + 2 * TB * 4              # cls, double-buffered f32
            + D * D * 2 + D * 4 + 2 * D * 4   # resident W / b / mu
            + 2 * 8 * 128 * 4         # output block
            + 4 * TB * D * 4)         # f32 temporaries (z, diffs) headroom
    try:
        phys = int(pltpu.get_tpu_info().vmem_capacity_bytes)
    except Exception:
        phys = 64 * 1024 * 1024       # conservative: v7x per-TensorCore VMEM
    vmem_limit = min(max(need + (4 << 20), 16 << 20), phys * 3 // 4)
    vmem_limit = max(vmem_limit, need)

    if NC > 1:
        dims = (pltpu.CORE_PARALLEL, pltpu.ARBITRARY)   # real core sharding (v7x)
    else:
        dims = ("arbitrary", "arbitrary")

    cost = pl.CostEstimate(
        flops=int(2 * B_pad * D * D + 16 * B_pad * D),
        transcendentals=int(3 * B_pad),
        bytes_accessed=int(B_pad * D * 2 + B_pad * 4 + D * D * 2 + D * 4
                           + 2 * D * 4 + NC * 8 * 128 * 4),
    )

    acc = pl.pallas_call(
        kernel,
        out_shape=out_shape,
        grid_spec=pltpu.PrefetchScalarGridSpec(
            num_scalar_prefetch=0,
            grid=(NC, tiles_per_core),
            in_specs=[x_spec, cls_spec, w_spec, b_spec, mu_spec],
            out_specs=out_spec),
        compiler_params=pltpu.CompilerParams(
            dimension_semantics=dims,
            vmem_limit_bytes=int(vmem_limit)),
        cost_estimate=cost,
    )(x_p, cls_p, w_in, b2, mu2)

    # ---- finalize: ~10 scalar flops + the flow's constant log-det (glue) ----
    totals = jnp.sum(acc, axis=0)                 # (8, 128)
    s_gmm, s_g0, s_g1 = totals[0, 0], totals[0, 1], totals[0, 2]
    c0, c1 = totals[0, 3], totals[0, 4]
    # TODO(synk): slogdet (the flow's log-det) has no clean Pallas equivalent;
    # it stays as a tiny XLA op on the f32 weights.
    logdet = jnp.linalg.slogdet(W_f32)[1]
    nll_global = -(s_gmm / float(B) + logdet)
    loss0 = jnp.where(c0 > 0.0, -s_g0 / jnp.maximum(c0, 1.0), 0.0)
    loss1 = jnp.where(c1 > 0.0, -s_g1 / jnp.maximum(c1, 1.0), 0.0)
    return nll_global + float(lam1) * loss0 + float(lam2) * loss1


def reference_loss(x, mask_lvl2, W, b, mu, lam1, sig1, lam2, sig2):
    # Pure-JAX mirror of the PyTorch forward (verification only).
    z = x @ W + b
    logdet = jnp.linalg.slogdet(W)[1]

    def lp_sum(mu_row, sigma):
        d = (z - mu_row) / sigma
        return jnp.sum(-0.5 * d * d - jnp.log(sigma) - 0.5 * LOG2PI, axis=1)

    lpc0 = lp_sum(mu[0], 1.0)
    lpc1 = lp_sum(mu[1], 1.0)
    lp_gmm = jax.scipy.special.logsumexp(
        jnp.stack([lpc0, lpc1], axis=0) + jnp.log(0.5), axis=0)
    nll_global = -(lp_gmm + logdet).mean()

    lp0 = lp_sum(mu[0], sig1)
    lp1 = lp_sum(mu[1], sig2)
    nm = ~mask_lvl2
    loss0 = jnp.where(nm.any(),
                      -jnp.sum(jnp.where(nm, lp0, 0.0)) / jnp.maximum(nm.sum(), 1),
                      0.0)
    loss1 = jnp.where(mask_lvl2.any(),
                      -jnp.sum(jnp.where(mask_lvl2, lp1, 0.0)) / jnp.maximum(mask_lvl2.sum(), 1),
                      0.0)
    return nll_global + lam1 * loss0 + lam2 * loss1


if __name__ == "__main__":
    B, D = 8, 32
    lam1, sig1, lam2, sig2 = 0.5, 0.7, 0.8, 1.3

    key = jax.random.PRNGKey(0)
    kx, kw, kb = jax.random.split(key, 3)

    x = jax.random.normal(kx, (B, D), dtype=jnp.float32)
    # Deterministic, well-conditioned invertible flow weights.
    W = jnp.eye(D, dtype=jnp.float32) + 0.05 * jax.random.normal(kw, (D, D), dtype=jnp.float32)
    b = 0.1 * jax.random.normal(kb, (D,), dtype=jnp.float32)
    # GMM prior means: component 0 at -1, component 1 at +1.
    mu = jnp.stack([-jnp.ones((D,), jnp.float32), jnp.ones((D,), jnp.float32)], axis=0)
    # lvl2 mask: every other sample.
    mask_lvl2 = (jnp.arange(B) % 2 == 1)

    # Pre-round x / W to bf16-representable values so the bf16-streaming kernel
    # (f32 accumulation) can be checked tightly against the f32 reference.
    x = x.astype(jnp.bfloat16).astype(jnp.float32)
    W = W.astype(jnp.bfloat16).astype(jnp.float32)

    loss = guided_flow_loss(x, mask_lvl2, W, b, mu, lam1, sig1, lam2, sig2)
    loss = jax.block_until_ready(loss)

    ref = reference_loss(x, mask_lvl2, W, b, mu, lam1, sig1, lam2, sig2)
    ref = jax.block_until_ready(ref)

    if not bool(jnp.allclose(loss, ref, rtol=1e-4, atol=1e-4)):
        raise AssertionError(f"mismatch: pallas={loss} ref={ref}")

    print("KERNEL_OK")
</pallas_src>

<mosaic_0001>
module attributes {stable_mosaic.version = 11 : i64} {
  func.func @_guided_flow_loss_kernel(%arg0: i32, %arg1: i32, %arg2: memref<8x32xbf16, #tpu.memory_space<vmem>>, %arg3: memref<8x1xf32, #tpu.memory_space<vmem>>, %arg4: memref<32x32xbf16, #tpu.memory_space<vmem>>, %arg5: memref<1x32xf32, #tpu.memory_space<vmem>>, %arg6: memref<2x32xf32, #tpu.memory_space<vmem>>, %arg7: memref<1x8x128xf32, #tpu.memory_space<vmem>>) attributes {dimension_semantics = [#tpu.dimension_semantics<arbitrary>, #tpu.dimension_semantics<arbitrary>], iteration_bounds = array<i64: 1, 1>, scalar_prefetch = 0 : i64, scratch_operands = 0 : i64, tpu.core_type = #tpu.core_type<tc>, window_params = [{transform_indices = @transform_0, window_bounds = array<i64: 8, 32>}, {transform_indices = @transform_1, window_bounds = array<i64: 8, 1>}, {pipeline_mode = #tpu.pipeline_mode<synchronous>, transform_indices = @transform_2, window_bounds = array<i64: 32, 32>}, {pipeline_mode = #tpu.pipeline_mode<synchronous>, transform_indices = @transform_3, window_bounds = array<i64: 1, 32>}, {pipeline_mode = #tpu.pipeline_mode<synchronous>, transform_indices = @transform_4, window_bounds = array<i64: 2, 32>}, {transform_indices = @transform_5, window_bounds = array<i64: 1, 8, 128>}]} {
    %c0_i32 = arith.constant 0 : i32
    %0 = arith.cmpi eq, %arg1, %c0_i32 : i32
    %1 = arith.extui %0 : i1 to i32
    %c0_i32_0 = arith.constant 0 : i32
    %2 = arith.cmpi ne, %1, %c0_i32_0 : i32
    scf.if %2 {
      %cst_60 = arith.constant 0.000000e+00 : f32
      %102 = vector.broadcast %cst_60 : f32 to vector<8x128xf32>
      %c0_61 = arith.constant 0 : index
      %c0_62 = arith.constant 0 : index
      %c0_63 = arith.constant 0 : index
      %103 = vector.load %arg7[%c0_61, %c0_62, %c0_63] : memref<1x8x128xf32, #tpu.memory_space<vmem>>, vector<1x8x128xf32>
      %104 = vector.shape_cast %103 : vector<1x8x128xf32> to vector<8x128xf32>
      %105 = vector.shape_cast %102 : vector<8x128xf32> to vector<1x8x128xf32>
      tpu.vector_store %arg7[%c0_61, %c0_62, %c0_63], %105 {strides = array<i32>} : memref<1x8x128xf32, #tpu.memory_space<vmem>>, vector<1x8x128xf32>,
    } else {
    }
    %c0 = arith.constant 0 : index
    %c0_1 = arith.constant 0 : index
    %3 = vector.load %arg2[%c0, %c0_1] : memref<8x32xbf16, #tpu.memory_space<vmem>>, vector<8x32xbf16>
    %c0_2 = arith.constant 0 : index
    %c0_3 = arith.constant 0 : index
    %4 = vector.load %arg4[%c0_2, %c0_3] : memref<32x32xbf16, #tpu.memory_space<vmem>>, vector<32x32xbf16>
    %cst = arith.constant dense<0.000000e+00> : vector<8x32xf32>
    %5 = tpu.matmul %3, %4, %cst {dimension_numbers = #tpu.dot_dimension_numbers<[1], [0], [0], [1], [0, 0, 1, 1], [], []>} : vector<8x32xbf16>, vector<32x32xbf16>, vector<8x32xf32> -> vector<8x32xf32>
    %c0_4 = arith.constant 0 : index
    %c0_5 = arith.constant 0 : index
    %6 = vector.load %arg5[%c0_4, %c0_5] : memref<1x32xf32, #tpu.memory_space<vmem>>, vector<1x32xf32>
    %7 = vector.broadcast %6 : vector<1x32xf32> to vector<8x32xf32>
    %8 = arith.addf %5, %7 : vector<8x32xf32>
    %c0_6 = arith.constant 0 : index
    %c0_7 = arith.constant 0 : index
    %9 = vector.load %arg6[%c0_6, %c0_7] : memref<2x32xf32, #tpu.memory_space<vmem>>, vector<1x32xf32>
    %10 = vector.broadcast %9 : vector<1x32xf32> to vector<8x32xf32>
    %11 = arith.subf %8, %10 : vector<8x32xf32>
    %c1 = arith.constant 1 : index
    %c0_8 = arith.constant 0 : index
    %12 = vector.load %arg6[%c1, %c0_8] : memref<2x32xf32, #tpu.memory_space<vmem>>, vector<1x32xf32>
    %13 = vector.broadcast %12 : vector<1x32xf32> to vector<8x32xf32>
    %14 = arith.subf %8, %13 : vector<8x32xf32>
    %15 = arith.mulf %11, %11 : vector<8x32xf32>
    %cst_9 = arith.constant dense<0.000000e+00> : vector<8xf32>
    %16 = vector.multi_reduction <add>, %15, %cst_9 [1] : vector<8x32xf32> to vector<8xf32>
    %17 = vector.shape_cast %16 : vector<8xf32> to vector<8x1xf32>
    %18 = arith.mulf %14, %14 : vector<8x32xf32>
    %cst_10 = arith.constant dense<0.000000e+00> : vector<8xf32>
    %19 = vector.multi_reduction <add>, %18, %cst_10 [1] : vector<8x32xf32> to vector<8xf32>
    %20 = vector.shape_cast %19 : vector<8xf32> to vector<8x1xf32>
    %cst_11 = arith.constant -5.000000e-01 : f32
    %21 = vector.broadcast %cst_11 : f32 to vector<8x1xf32>
    %22 = arith.mulf %21, %17 : vector<8x1xf32>
    %cst_12 = arith.constant 29.4060326 : f32
    %23 = vector.broadcast %cst_12 : f32 to vector<8x1xf32>
    %24 = arith.subf %22, %23 : vector<8x1xf32>
    %cst_13 = arith.constant -5.000000e-01 : f32
    %25 = vector.broadcast %cst_13 : f32 to vector<8x1xf32>
    %26 = arith.mulf %25, %20 : vector<8x1xf32>
    %cst_14 = arith.constant 29.4060326 : f32
    %27 = vector.broadcast %cst_14 : f32 to vector<8x1xf32>
    %28 = arith.subf %26, %27 : vector<8x1xf32>
    %29 = arith.maximumf %24, %28 : vector<8x1xf32>
    %30 = arith.subf %24, %29 : vector<8x1xf32>
    %31 = math.exp %30 : vector<8x1xf32>
    %32 = arith.subf %28, %29 : vector<8x1xf32>
    %33 = math.exp %32 : vector<8x1xf32>
    %34 = arith.addf %31, %33 : vector<8x1xf32>
    %35 = math.log %34 : vector<8x1xf32>
    %36 = arith.addf %29, %35 : vector<8x1xf32>
    %cst_15 = arith.constant -0.693147182 : f32
    %37 = vector.broadcast %cst_15 : f32 to vector<8x1xf32>
    %38 = arith.addf %36, %37 : vector<8x1xf32>
    %cst_16 = arith.constant -1.02040815 : f32
    %39 = vector.broadcast %cst_16 : f32 to vector<8x1xf32>
    %40 = arith.mulf %39, %17 : vector<8x1xf32>
    %cst_17 = arith.constant 17.9924355 : f32
    %41 = vector.broadcast %cst_17 : f32 to vector<8x1xf32>
    %42 = arith.subf %40, %41 : vector<8x1xf32>
    %cst_18 = arith.constant -2.958580e-01 : f32
    %43 = vector.broadcast %cst_18 : f32 to vector<8x1xf32>
    %44 = arith.mulf %43, %20 : vector<8x1xf32>
    %cst_19 = arith.constant 37.8016891 : f32
    %45 = vector.broadcast %cst_19 : f32 to vector<8x1xf32>
    %46 = arith.subf %44, %45 : vector<8x1xf32>
    %c0_20 = arith.constant 0 : index
    %c0_21 = arith.constant 0 : index
    %47 = vector.load %arg3[%c0_20, %c0_21] : memref<8x1xf32, #tpu.memory_space<vmem>>, vector<8x1xf32>
    %cst_22 = arith.constant 1.000000e+00 : f32
    %48 = vector.broadcast %cst_22 : f32 to vector<8x1xf32>
    %49 = arith.cmpf oeq, %47, %48 : vector<8x1xf32>
    %cst_23 = arith.constant 1.000000e+00 : f32
    %cst_24 = arith.constant 0.000000e+00 : f32
    %50 = vector.broadcast %cst_23 : f32 to vector<8x1xf32>
    %51 = vector.broadcast %cst_24 : f32 to vector<8x1xf32>
    %52 = arith.select %49, %50, %51 : vector<8x1xi1>, vector<8x1xf32>
    %cst_25 = arith.constant 0.000000e+00 : f32
    %53 = vector.broadcast %cst_25 : f32 to vector<8x1xf32>
    %54 = arith.cmpf oeq, %47, %53 : vector<8x1xf32>
    %cst_26 = arith.constant 1.000000e+00 : f32
    %cst_27 = arith.constant 0.000000e+00 : f32
    %55 = vector.broadcast %cst_26 : f32 to vector<8x1xf32>
    %56 = vector.broadcast %cst_27 : f32 to vector<8x1xf32>
    %57 = arith.select %54, %55, %56 : vector<8x1xi1>, vector<8x1xf32>
    %58 = arith.addf %57, %52 : vector<8x1xf32>
    %c0_28 = arith.constant 0 : index
    %c0_29 = arith.constant 0 : index
    %c0_30 = arith.constant 0 : index
    %59 = vector.load %arg7[%c0_28, %c0_29, %c0_30] : memref<1x8x128xf32, #tpu.memory_space<vmem>>, vector<1x1x1xf32>
    %60 = vector.shape_cast %59 : vector<1x1x1xf32> to vector<1x1xf32>
    %61 = arith.mulf %58, %38 : vector<8x1xf32>
    %cst_31 = arith.constant dense<0.000000e+00> : vector<1xf32>
    %62 = vector.multi_reduction <add>, %61, %cst_31 [0] : vector<8x1xf32> to vector<1xf32>
    %63 = vector.shape_cast %62 : vector<1xf32> to vector<1x1xf32>
    %64 = arith.addf %60, %63 : vector<1x1xf32>
    %c0_32 = arith.constant 0 : index
    %c0_33 = arith.constant 0 : index
    %c0_34 = arith.constant 0 : index
    %65 = vector.load %arg7[%c0_32, %c0_33, %c0_34] : memref<1x8x128xf32, #tpu.memory_space<vmem>>, vector<1x1x1xf32>
    %66 = vector.shape_cast %65 : vector<1x1x1xf32> to vector<1x1xf32>
    %67 = vector.shape_cast %64 : vector<1x1xf32> to vector<1x1x1xf32>
    tpu.vector_store %arg7[%c0_32, %c0_33, %c0_34], %67 {strides = array<i32>} : memref<1x8x128xf32, #tpu.memory_space<vmem>>, vector<1x1x1xf32>,
    %c0_35 = arith.constant 0 : index
    %c0_36 = arith.constant 0 : index
    %c1_37 = arith.constant 1 : index
    %68 = vector.load %arg7[%c0_35, %c0_36, %c1_37] : memref<1x8x128xf32, #tpu.memory_space<vmem>>, vector<1x1x1xf32>
    %69 = vector.shape_cast %68 : vector<1x1x1xf32> to vector<1x1xf32>
    %70 = arith.mulf %57, %42 : vector<8x1xf32>
    %cst_38 = arith.constant dense<0.000000e+00> : vector<1xf32>
    %71 = vector.multi_reduction <add>, %70, %cst_38 [0] : vector<8x1xf32> to vector<1xf32>
    %72 = vector.shape_cast %71 : vector<1xf32> to vector<1x1xf32>
    %73 = arith.addf %69, %72 : vector<1x1xf32>
    %c0_39 = arith.constant 0 : index
    %c0_40 = arith.constant 0 : index
    %c1_41 = arith.constant 1 : index
    %74 = vector.load %arg7[%c0_39, %c0_40, %c1_41] : memref<1x8x128xf32, #tpu.memory_space<vmem>>, vector<1x1x1xf32>
    %75 = vector.shape_cast %74 : vector<1x1x1xf32> to vector<1x1xf32>
    %76 = vector.shape_cast %73 : vector<1x1xf32> to vector<1x1x1xf32>
    tpu.vector_store %arg7[%c0_39, %c0_40, %c1_41], %76 {strides = array<i32>} : memref<1x8x128xf32, #tpu.memory_space<vmem>>, vector<1x1x1xf32>,
    %c0_42 = arith.constant 0 : index
    %c0_43 = arith.constant 0 : index
    %c2 = arith.constant 2 : index
    %77 = vector.load %arg7[%c0_42, %c0_43, %c2] : memref<1x8x128xf32, #tpu.memory_space<vmem>>, vector<1x1x1xf32>
    %78 = vector.shape_cast %77 : vector<1x1x1xf32> to vector<1x1xf32>
    %79 = arith.mulf %52, %46 : vector<8x1xf32>
    %cst_44 = arith.constant dense<0.000000e+00> : vector<1xf32>
    %80 = vector.multi_reduction <add>, %79, %cst_44 [0] : vector<8x1xf32> to vector<1xf32>
    %81 = vector.shape_cast %80 : vector<1xf32> to vector<1x1xf32>
    %82 = arith.addf %78, %81 : vector<1x1xf32>
    %c0_45 = arith.constant 0 : index
    %c0_46 = arith.constant 0 : index
    %c2_47 = arith.constant 2 : index
    %83 = vector.load %arg7[%c0_45, %c0_46, %c2_47] : memref<1x8x128xf32, #tpu.memory_space<vmem>>, vector<1x1x1xf32>
    %84 = vector.shape_cast %83 : vector<1x1x1xf32> to vector<1x1xf32>
    %85 = vector.shape_cast %82 : vector<1x1xf32> to vector<1x1x1xf32>
    tpu.vector_store %arg7[%c0_45, %c0_46, %c2_47], %85 {strides = array<i32>} : memref<1x8x128xf32, #tpu.memory_space<vmem>>, vector<1x1x1xf32>,
    %c0_48 = arith.constant 0 : index
    %c0_49 = arith.constant 0 : index
    %c3 = arith.constant 3 : index
    %86 = vector.load %arg7[%c0_48, %c0_49, %c3] : memref<1x8x128xf32, #tpu.memory_space<vmem>>, vector<1x1x1xf32>
    %87 = vector.shape_cast %86 : vector<1x1x1xf32> to vector<1x1xf32>
    %cst_50 = arith.constant dense<0.000000e+00> : vector<1xf32>
    %88 = vector.multi_reduction <add>, %57, %cst_50 [0] : vector<8x1xf32> to vector<1xf32>
    %89 = vector.shape_cast %88 : vector<1xf32> to vector<1x1xf32>
    %90 = arith.addf %87, %89 : vector<1x1xf32>
    %c0_51 = arith.constant 0 : index
    %c0_52 = arith.constant 0 : index
    %c3_53 = arith.constant 3 : index
    %91 = vector.load %arg7[%c0_51, %c0_52, %c3_53] : memref<1x8x128xf32, #tpu.memory_space<vmem>>, vector<1x1x1xf32>
    %92 = vector.shape_cast %91 : vector<1x1x1xf32> to vector<1x1xf32>
    %93 = vector.shape_cast %90 : vector<1x1xf32> to vector<1x1x1xf32>
    tpu.vector_store %arg7[%c0_51, %c0_52, %c3_53], %93 {strides = array<i32>} : memref<1x8x128xf32, #tpu.memory_space<vmem>>, vector<1x1x1xf32>,
    %c0_54 = arith.constant 0 : index
    %c0_55 = arith.constant 0 : index
    %c4 = arith.constant 4 : index
    %94 = vector.load %arg7[%c0_54, %c0_55, %c4] : memref<1x8x128xf32, #tpu.memory_space<vmem>>, vector<1x1x1xf32>
    %95 = vector.shape_cast %94 : vector<1x1x1xf32> to vector<1x1xf32>
    %cst_56 = arith.constant dense<0.000000e+00> : vector<1xf32>
    %96 = vector.multi_reduction <add>, %52, %cst_56 [0] : vector<8x1xf32> to vector<1xf32>
    %97 = vector.shape_cast %96 : vector<1xf32> to vector<1x1xf32>
    %98 = arith.addf %95, %97 : vector<1x1xf32>
    %c0_57 = arith.constant 0 : index
    %c0_58 = arith.constant 0 : index
    %c4_59 = arith.constant 4 : index
    %99 = vector.load %arg7[%c0_57, %c0_58, %c4_59] : memref<1x8x128xf32, #tpu.memory_space<vmem>>, vector<1x1x1xf32>
    %100 = vector.shape_cast %99 : vector<1x1x1xf32> to vector<1x1xf32>
    %101 = vector.shape_cast %98 : vector<1x1xf32> to vector<1x1x1xf32>
    tpu.vector_store %arg7[%c0_57, %c0_58, %c4_59], %101 {strides = array<i32>} : memref<1x8x128xf32, #tpu.memory_space<vmem>>, vector<1x1x1xf32>,
    return
  }
  func.func @transform_0(%arg0: i32, %arg1: i32) -> (i32, i32) {
    %c1_i32 = arith.constant 1 : i32
    %0 = arith.muli %arg0, %c1_i32 : i32
    %1 = arith.addi %0, %arg1 : i32
    %c0_i32 = arith.constant 0 : i32
    %c0_i32_0 = arith.constant 0 : i32
    return %1, %c0_i32 : i32, i32
  }
  func.func @transform_1(%arg0: i32, %arg1: i32) -> (i32, i32) {
    %c1_i32 = arith.constant 1 : i32
    %0 = arith.muli %arg0, %c1_i32 : i32
    %1 = arith.addi %0, %arg1 : i32
    %c0_i32 = arith.constant 0 : i32
    %c0_i32_0 = arith.constant 0 : i32
    return %1, %c0_i32 : i32, i32
  }
  func.func @transform_2(%arg0: i32, %arg1: i32) -> (i32, i32) {
    %c0_i32 = arith.constant 0 : i32
    %c0_i32_0 = arith.constant 0 : i32
    %c0_i32_1 = arith.constant 0 : i32
    return %c0_i32, %c0_i32_0 : i32, i32
  }
  func.func @transform_3(%arg0: i32, %arg1: i32) -> (i32, i32) {
    %c0_i32 = arith.constant 0 : i32
    %c0_i32_0 = arith.constant 0 : i32
    %c0_i32_1 = arith.constant 0 : i32
    return %c0_i32, %c0_i32_0 : i32, i32
  }
  func.func @transform_4(%arg0: i32, %arg1: i32) -> (i32, i32) {
    %c0_i32 = arith.constant 0 : i32
    %c0_i32_0 = arith.constant 0 : i32
    %c0_i32_1 = arith.constant 0 : i32
    return %c0_i32, %c0_i32_0 : i32, i32
  }
  func.func @transform_5(%arg0: i32, %arg1: i32) -> (i32, i32, i32) {
    %c0_i32 = arith.constant 0 : i32
    %c0_i32_0 = arith.constant 0 : i32
    %c0_i32_1 = arith.constant 0 : i32
    return %arg0, %c0_i32, %c0_i32_0 : i32, i32, i32
  }
}

</mosaic_0001>

<llo_original>
// kernel: tpu_custom_call.1
$region0: #{tpu_custom_call.1}
  #allocation0 [shape = 'u32[]', space=smem, size = 0x4, offset = 0x4, fixed_abs, tag = 'smem constant byte address 0x4 - core index']
  #allocation1 [shape = 'u32[144,128]{1,0:T(1,128)}', space=vmem, size = 0x12000, scoped, tag = 'internal scratch']
  %s0 = inlined_call_operand.hbm [shape: bf16[8,32], index: 0, kind: input, shape index: {}]
  %s1 = inlined_call_operand.vmem [shape: f32[8,1], index: 1, kind: input, shape index: {}]
  %s2 = inlined_call_operand.vmem [shape: bf16[32,32], index: 2, kind: input, shape index: {}]
  %s3 = inlined_call_operand.vmem [shape: f32[1,32], index: 3, kind: input, shape index: {}]
  %s4 = inlined_call_operand.vmem [shape: f32[2,32], index: 4, kind: input, shape index: {}]
  %s5 = inlined_call_operand.hbm [shape: f32[1,8,128], index: 5, kind: output, shape index: {}]
  %s6 = sld [smem:[#allocation0]]
  $region38: #{tpu_custom_call.1} parent=0
    _
  %s8 = ssub.s32 1, %s6
  %s9 = scalar_select 0, %s8, %s6
  $region1: #{tpu_custom_call.1} parent=0
    #allocation2 [shape = 'u8[2048]{0}', space=vmem, size = 0x800, scoped, tag = 'input window, operand 0, single buffered']
    #allocation3 [shape = 's32[1]{0}', space=sflag, size = 0x4, scoped, tag = 'scoped memory for tpu_custom_call.1']
    #allocation4 [shape = 's32[1]{0}', space=sflag, size = 0x4, scoped, tag = 'scoped memory for tpu_custom_call.1']
    #allocation5 [shape = 'u8[4096]{0}', space=vmem, size = 0x1000, scoped, tag = 'output window, operand 0, single buffered']
    %10 = vsyncpa [#allocation3], 0
    %11 = vsyncpa [#allocation4], 0
    // Predicated region
    $region2: #{tpu_custom_call.1} parent=1 // pred_check
      _
    $region3: #{tpu_custom_call.1} parent=1 // pred_check_branch
      %13 = sbr.rel (0) target = $region5
    $region4: #{tpu_custom_call.1} parent=1 // pred_region
      %s14 = sadd.s32 0, 0
      %s16 = ssub.s32 64, 64
      %17 = vsyncadd [#allocation3], %s16
      %s18 = smul.addr %s14, 64
      %s19 = scalar_lea.hbm %s0, %s18
      %s21 = sshll.u32 [#allocation2], 4
      %s22 = int_to_ptr.vmem [resolvable:$true] %s21
      %24 = dma.hbm_to_vmem [thread:$0]  %s19, 64, %s22, [#allocation3]
    $region5: #{tpu_custom_call.1} parent=1 // pred_fallthru
      _
    // Predicated region
    $region6: #{tpu_custom_call.1} parent=1 // pred_check
      _
    $region7: #{tpu_custom_call.1} parent=1 // pred_check_branch
      %26 = sbr.rel (0) target = $region9
    $region8: #{tpu_custom_call.1} parent=1 // pred_region
      %s27 = sadd.s32 0, 0
      %p28 = scmp.lt.s32.totalorder %s27, 0
      %s29 = scalar_select %p28, %s27, 0
      %s30 = smul.addr %s29, 8
      %s31 = scalar_lea.vmem %s1, %s30
      %s32 = sadd.s32 0, 0
    $region9: #{tpu_custom_call.1} parent=1 // pred_fallthru
      _
    // Predicated region
    $region10: #{tpu_custom_call.1} parent=1 // pred_check
      _
    $region11: #{tpu_custom_call.1} parent=1 // pred_check_branch
      %34 = sbr.rel (0) target = $region13
    $region12: #{tpu_custom_call.1} parent=1 // pred_region
      _
    $region13: #{tpu_custom_call.1} parent=1 // pred_fallthru
      _
    // Predicated region
    $region14: #{tpu_custom_call.1} parent=1 // pred_check
      _
    $region15: #{tpu_custom_call.1} parent=1 // pred_check_branch
      %36 = sbr.rel (0) target = $region17
    $region16: #{tpu_custom_call.1} parent=1 // pred_region
      _
    $region17: #{tpu_custom_call.1} parent=1 // pred_fallthru
      _
    // Predicated region
    $region18: #{tpu_custom_call.1} parent=1 // pred_check
      _
    $region19: #{tpu_custom_call.1} parent=1 // pred_check_branch
      %38 = sbr.rel (0) target = $region21
    $region20: #{tpu_custom_call.1} parent=1 // pred_region
      _
    $region21: #{tpu_custom_call.1} parent=1 // pred_fallthru
      _
    // Predicated region
    $region22: #{tpu_custom_call.1} parent=1 // pred_check
      _
    $region23: #{tpu_custom_call.1} parent=1 // pred_check_branch
      %40 = sbr.rel (0) target = $region25
    $region24: #{tpu_custom_call.1} parent=1 // pred_region
      %41 = dma.done [#allocation3], 64
    $region25: #{tpu_custom_call.1} parent=1 // pred_fallthru
      _
    %s42 = sadd.s32 0, 0
    %p43 = scmp.lt.s32.totalorder %s42, 0
    %s44 = scalar_select %p43, %s42, 0
    %s45 = smul.addr %s44, 8
    %s46 = scalar_lea.vmem %s1, %s45
    %s47 = sadd.s32 0, 0
    %s48 = sadd.s32 0, 0
    %p49 = scmp.lt.s32.totalorder %s48, 0
    %s50 = scalar_select %p49, %s48, 0
    %s51 = smul.addr %s50, 8
    %s52 = scalar_lea.vmem %s1, %s51
    %s53 = sadd.s32 0, 0
    %p55 = scmp.eq.s32.totalorder 0, 0
    // Predicated region
    $region26: #{tpu_custom_call.1} parent=1 // pred_check
      %p56 = pneg %p55
    $region27: #{tpu_custom_call.1} parent=1 // pred_check_branch
      %58 = sbr.rel (%p56) target = $region29
    $region28: #{tpu_custom_call.1} parent=1 // pred_region
      %59 = vst [vmem:[#allocation5] sm:$0xff] 0.0
    $region29: #{tpu_custom_call.1} parent=1 // pred_fallthru
      _
    %v60 = vld [vmem:[#allocation2] sm:$0xf]
    %v61 = vld [vmem:[%s2] sm:$0xf]
    %v62 = vld [vmem:[%s2 + $0x4] sm:$0xf]
    %v63 = vld [vmem:[%s2 + $0x8] sm:$0xf]
    %v64 = vld [vmem:[%s2 + $0xc] sm:$0xf]
    %v65 = vld [vmem:[%s3] sm:$0x1]
    %v67 = vlaneseq
    %v68 = vshrl.u32 %v67, 7
    %v69 = vsub.s32 0, %v68
    %v70 = vrot.slane %v65, %v69
    %v76 = vunpack.c.l.b16 %v61
    %v77 = vunpack.c.l.b16 %v62
    %v78 = vunpack.c.l.b16 %v63
    %v79 = vunpack.c.l.b16 %v64
    %v80 = vpack.c.b16 %v77, %v76
    %v81 = vpack.c.b16 %v79, %v78
    %vm84 = vcmask 261120
    %v86 = vsel %vm84, %v60, 0
    %88 = vmatprep.subr.bf16.mxu0 0
    %89 = vmatpush1.bf16.msra.mxu0 %v80
    %90 = vmatprep.subr.bf16.mxu0 0
    %91 = vmatpush1.bf16.msra.mxu0 %v81
    %92 = vmatprep.subr.bf16.mxu0 0
    %93 = vmatpush1.bf16.msra.mxu0 0
    %94 = vmatprep.subr.bf16.mxu0 0
    %95 = vmatpush1.bf16.msra.mxu0 0
    %96 = vmatprep.subr.bf16.mxu0 0
    %97 = vmatpush1.bf16.msra.mxu0 0
    %98 = vmatprep.subr.bf16.mxu0 0
    %99 = vmatpush1.bf16.msra.mxu0 0
    %100 = vmatprep.subr.bf16.mxu0 0
    %101 = vmatpush1.bf16.msra.mxu0 0
    %102 = vmatprep.subr.bf16.mxu0 0
    %103 = vmatpush1.bf16.msra.mxu0 0
    %104 = vmatprep.subr.bf16.mxu0 0
    %105 = vmatpush1.bf16.msra.mxu0 0
    %106 = vmatprep.subr.bf16.mxu0 0
    %107 = vmatpush1.bf16.msra.mxu0 0
    %108 = vmatprep.subr.bf16.mxu0 0
    %109 = vmatpush1.bf16.msra.mxu0 0
    %110 = vmatprep.subr.bf16.mxu0 0
    %111 = vmatpush1.bf16.msra.mxu0 0
    %112 = vmatprep.subr.bf16.mxu0 0
    %113 = vmatpush1.bf16.msra.mxu0 0
    %114 = vmatprep.subr.bf16.mxu0 0
    %115 = vmatpush1.bf16.msra.mxu0 0
    %116 = vmatprep.subr.bf16.mxu0 0
    %117 = vmatpush1.bf16.msra.mxu0 0
    %118 = vmatprep.subr.bf16.mxu0 0
    %119 = vmatpush1.bf16.msra.mxu0 0
    %120 = vmatprep.mubr.bf16.mxu0 0
    %121 = vmatmul.mubr.bf16.gmra.mrb[0].mxu0 %v86
    %v122 = vpop.f32.mrb[0].mxu0
    %v123 = vadd.f32 %v70, %v122
    %v124 = vpop.f32.mrb[0].mxu0
    %v125 = vpop.f32.mrb[0].mxu0
    %v126 = vpop.f32.mrb[0].mxu0
    %127 = vdwg.mxu0
    %v128 = vld [vmem:[%s4] sm:$0x1]
    %v129 = vlaneseq
    %v130 = vshrl.u32 %v129, 7
    %v131 = vsub.s32 0, %v130
    %v132 = vrot.slane %v128, %v131
    %v133 = vsub.f32 %v123, %v132
    %v134 = vld [vmem:[%s4 + $0x1] sm:$0x1]
    %v135 = vlaneseq
    %v136 = vshrl.u32 %v135, 7
    %v137 = vsub.s32 0, %v136
    %v138 = vrot.slane %v134, %v137
    %v139 = vsub.f32 %v123, %v138
    %v140 = vmul.f32 %v133, %v133
    %v141 = vsel %vm84, %v140, 0.0
    %142 = vadd.xlane.f32.xlu0 %v141
    %v143 = vpop.xlane.xlu0 %142
    %v144 = vmul.f32 %v139, %v139
    %v145 = vsel %vm84, %v144, 0.0
    %146 = vadd.xlane.f32.xlu0 %v145
    %v147 = vpop.xlane.xlu0 %146
    %v148 = vmul.f32 %v143, -0.5
    %v149 = vsub.f32 %v148, 29.406033
    %v150 = vmul.f32 %v147, -0.5
    %v151 = vsub.f32 %v150, 29.406033
    %v152 = vmax.f32 %v149, %v151
    %v153 = vsub.f32 %v149, %v152
    %v154 = vmul.f32 %v153, 1.442695
    %v155 = vpow.pop %v154
    %v156 = vsub.f32 %v151, %v152
    %v157 = vmul.f32 %v156, 1.442695
    %v158 = vpow.pop %v157
    %v159 = vadd.f32 %v155, %v158
    %v160 = vlog2.pop %v159
    %v161 = vmul.f32 %v160, 0.6931472
    %v162 = vadd.f32 %v152, %v161
    %v163 = vadd.f32 %v162, -0.6931472
    %v164 = vmul.f32 %v143, -1.0204082
    %v165 = vsub.f32 %v164, 17.992435
    %v166 = vmul.f32 %v147, -0.295858
    %v167 = vsub.f32 %v166, 37.80169
    %v168 = vld [vmem:[%s52] sm:$0xff]
    %vm169 = vcmp.eq.f32.partialorder %v168, 1.0
    %v170 = vsel %vm169, 1.0, 0.0
    %vm171 = vcmp.eq.f32.partialorder %v168, 0.0
    %v172 = vsel %vm171, 1.0, 0.0
    %v173 = vadd.f32 %v172, %v170
    %v174 = vld [vmem:[#allocation5] sm:$0x1]
    %v175 = vmul.f32 %v173, %v163
    %vm176 = vcmask 7168
    %v177 = vsel %vm176, %v175, 0.0
    %v178 = vrot.slane %v177, 4
    %v179 = vadd.f32 %v177, %v178
    %v180 = vrot.slane %v179, 2
    %v181 = vadd.f32 %v179, %v180
    %v182 = vrot.slane %v181, 1
    %v183 = vadd.f32 %v181, %v182
    %v184 = vadd.f32 %v174, %v183
    %vm185 = vcmask 0
    %186 = vst.msk [vmem:[#allocation5] sm:$0x1] %vm185, %v184
    %v187 = vld [vmem:[#allocation5] sm:$0x1]
    %v188 = vmul.f32 %v172, %v165
    %v189 = vsel %vm176, %v188, 0.0
    %v190 = vrot.slane %v189, 4
    %v191 = vadd.f32 %v189, %v190
    %v192 = vrot.slane %v191, 2
    %v193 = vadd.f32 %v191, %v192
    %v194 = vrot.slane %v193, 1
    %v195 = vadd.f32 %v193, %v194
    %197 = vrot.lane.b32.xlu0 %v195, 1
    %v198 = vpop.permute.xlu0 %197
    %v200 = vadd.f32 %v187, %v198
    %vm201 = vcmask 8200
    %202 = vst.msk [vmem:[#allocation5] sm:$0x1] %vm201, %v200
    %v203 = vld [vmem:[#allocation5] sm:$0x1]
    %v204 = vmul.f32 %v170, %v167
    %v205 = vsel %vm176, %v204, 0.0
    %v206 = vrot.slane %v205, 4
    %v207 = vadd.f32 %v205, %v206
    %v208 = vrot.slane %v207, 2
    %v209 = vadd.f32 %v207, %v208
    %v210 = vrot.slane %v209, 1
    %v211 = vadd.f32 %v209, %v210
    %213 = vrot.lane.b32.xlu0 %v211, 2
    %v214 = vpop.permute.xlu0 %213
    %v216 = vadd.f32 %v203, %v214
    %vm217 = vcmask 16400
    %218 = vst.msk [vmem:[#allocation5] sm:$0x1] %vm217, %v216
    %v219 = vld [vmem:[#allocation5] sm:$0x1]
    %v220 = vsel %vm176, %v172, 0.0
    %v221 = vrot.slane %v220, 4
    %v222 = vadd.f32 %v220, %v221
    %v223 = vrot.slane %v222, 2
    %v224 = vadd.f32 %v222, %v223
    %v225 = vrot.slane %v224, 1
    %v226 = vadd.f32 %v224, %v225
    %228 = vrot.lane.b32.xlu0 %v226, 3
    %v229 = vpop.permute.xlu0 %228
    %v231 = vadd.f32 %v219, %v229
    %vm232 = vcmask 24600
    %233 = vst.msk [vmem:[#allocation5] sm:$0x1] %vm232, %v231
    %v234 = vld [vmem:[#allocation5] sm:$0x1]
    %v235 = vsel %vm176, %v170, 0.0
    %v236 = vrot.slane %v235, 4
    %v237 = vadd.f32 %v235, %v236
    %v238 = vrot.slane %v237, 2
    %v239 = vadd.f32 %v237, %v238
    %v240 = vrot.slane %v239, 1
    %v241 = vadd.f32 %v239, %v240
    %243 = vrot.lane.b32.xlu0 %v241, 4
    %v244 = vpop.permute.xlu0 %243
    %v246 = vadd.f32 %v234, %v244
    %vm247 = vcmask 32800
    %248 = vst.msk [vmem:[#allocation5] sm:$0x1] %vm247, %v246
    // Predicated region
    $region30: #{tpu_custom_call.1} parent=1 // pred_check
      _
    $region31: #{tpu_custom_call.1} parent=1 // pred_check_branch
      %250 = sbr.rel (0) target = $region33
    $region32: #{tpu_custom_call.1} parent=1 // pred_region
      %s252 = ssub.s32 128, 128
      %253 = vsyncadd [#allocation4], %s252
      %s255 = sshll.u32 [#allocation5], 4
      %s256 = int_to_ptr.vmem [resolvable:$true] %s255
      %258 = dma.vmem_to_hbm [thread:$0]  %s256, 128, %s5, [#allocation4]
    $region33: #{tpu_custom_call.1} parent=1 // pred_fallthru
      _
    // Predicated region
    $region34: #{tpu_custom_call.1} parent=1 // pred_check
      _
    $region35: #{tpu_custom_call.1} parent=1 // pred_check_branch
      %260 = sbr.rel (0) target = $region37
    $region36: #{tpu_custom_call.1} parent=1 // pred_region
      %261 = dma.done [#allocation4], 128
    $region37: #{tpu_custom_call.1} parent=1 // pred_fallthru
      _
    %262 = vsyncpa [#allocation3], 1
    %263 = vsyncpa [#allocation4], 1

</llo_original>
